<compile_context>
chip_gen: v7x
topology: tpu7x:2x2x1
jax: 0.10.0
libtpu: 0.0.40
codegen_flags: <defaults>
</compile_context>

<pallas_src>
import numpy as np
import jax
import jax.numpy as jnp
from jax.experimental import pallas as pl
from jax.experimental.pallas import tpu as pltpu


def _build_interp_reflect_matrix(size: int, zoom: int) -> np.ndarray:
    """Dense (zoom*size, size) matrix combining align_corners=True bilinear
    interpolation to zoom*(size-1)+1 samples with the reflection fill used by
    upsampling_interpolation2d (negative-index wraparound matches torch/numpy)."""
    interp = zoom * (size - 1) + 1
    A = np.zeros((interp, size), dtype=np.float32)
    for a in range(interp):
        i0 = a // zoom
        frac = (a % zoom) / float(zoom)
        if frac == 0.0:
            A[a, i0] = 1.0
        else:
            A[a, i0] = 1.0 - frac
            A[a, i0 + 1] = frac
    out_size = zoom * size
    B = np.zeros((out_size, size), dtype=np.float32)
    for i in range(out_size):
        r = i if i < interp else 2 * (interp - 1) - i
        B[i] = A[r]
    return B


def _fused_upsample_kernel(bh_ref, bwt_ref, x_ref, o_ref):
    """bh_ref: (zH, H) resident.  bwt_ref: (W, zW) resident (B_w pre-transposed).
    x_ref: (Bc, H, W) input channel block.  o_ref: (Bc, zH, zW) output block."""
    bc, h, w = x_ref.shape
    zh = bh_ref.shape[0]
    zw = bwt_ref.shape[1]

    x = x_ref[...]                                            # (Bc, H, W) f32
    # Width pass: one 2-D matmul, contraction over the minor dim W (lane axis).
    u = jnp.dot(x.reshape(bc * h, w), bwt_ref[...],
                preferred_element_type=jnp.float32)           # (Bc*H, zW)
    u = u.reshape(bc, h, zw)                                  # (Bc, H, zW)

    # Height pass: batched MXU matmul (same 'bqk,bkd->bqd' pattern as flash-attn).
    bh_b = jnp.broadcast_to(bh_ref[...][None], (bc, zh, h))   # (Bc, zH, H)
    out = jnp.einsum('bph,bhq->bpq', bh_b, u,
                     preferred_element_type=jnp.float32)      # (Bc, zH, zW)
    o_ref[...] = out.astype(o_ref.dtype)


def _vmem_budget():
    """(scratch budget for block sizing, vmem_limit_bytes) per TPU generation."""
    try:
        cap = int(pltpu.get_tpu_info().vmem_capacity_bytes)
    except Exception:
        cap = 64 * 1024 * 1024
    if cap >= 100 * 1024 * 1024:            # v5e / v6e: 128 MiB physical VMEM
        return 48 * 1024 * 1024, 96 * 1024 * 1024
    else:                                   # v7x: 64 MiB per TensorCore
        return 20 * 1024 * 1024, 32 * 1024 * 1024


def _pick_channel_block(NC, H, W, zH, zW, budget_bytes):
    """Channel-block size: double-buffered in/out blocks plus in-kernel temporaries
    (f32) must fit the VMEM budget; keep >=2 grid steps so v7x megacore shards."""
    per_chan = 4 * (2 * H * W            # double-buffered input block
                    + 2 * zH * zW        # double-buffered output block
                    + H * zW             # width-pass intermediate u
                    + zH * H             # broadcast B_h copy
                    + zH * zW) + 256     # einsum result before store
    fixed = 4 * (zH * H + W * zW)        # resident interpolation matrices
    bc = max(1, (budget_bytes - fixed) // per_chan)
    if NC >= 2:
        bc = min(bc, pl.cdiv(NC, 2))     # grid >= 2 -> both v7x TensorCores busy
    return int(max(1, min(bc, NC)))


def _upsample_impl(x, zoom_factor, mode):
    assert mode == "bilinear", "only bilinear mode implemented"
    N, C, H, W = x.shape
    z = int(zoom_factor)
    zH, zW = z * H, z * W
    NC = N * C

    # Built from static shapes at trace time -> compile-time constants under jit.
    B_h = jnp.asarray(_build_interp_reflect_matrix(H, z))       # (zH, H)
    B_wT = jnp.asarray(_build_interp_reflect_matrix(W, z).T)    # (W, zW)

    xf = x.astype(jnp.float32).reshape(NC, H, W)                # pure reshape

    budget, vmem_limit = _vmem_budget()
    Bc = _pick_channel_block(NC, H, W, zH, zW, budget)
    grid = (pl.cdiv(NC, Bc),)

    cost = pl.CostEstimate(
        flops=2 * NC * (H * W * zW + zH * H * zW),
        transcendentals=0,
        bytes_accessed=4 * (NC * H * W + NC * zH * zW + zH * H + W * zW),
    )

    out = pl.pallas_call(
        _fused_upsample_kernel,
        out_shape=jax.ShapeDtypeStruct((NC, zH, zW), jnp.float32),
        grid_spec=pltpu.PrefetchScalarGridSpec(
            num_scalar_prefetch=0,
            grid=grid,
            in_specs=[
                pl.BlockSpec((zH, H), lambda b: (0, 0)),         # B_h resident
                pl.BlockSpec((W, zW), lambda b: (0, 0)),         # B_w^T resident
                pl.BlockSpec((Bc, H, W), lambda b: (b, 0, 0)),   # input channel block
            ],
            out_specs=pl.BlockSpec((Bc, zH, zW), lambda b: (b, 0, 0)),
        ),
        compiler_params=pltpu.CompilerParams(
            dimension_semantics=("parallel",),                   # megacore sharding
            vmem_limit_bytes=vmem_limit,
        ),
        cost_estimate=cost,
    )(B_h, B_wT, xf)

    return out.reshape(N, C, zH, zW)                             # pure reshape


# Single jit over the whole forward: constants folded, no eager dispatch per call.
upsampling_interpolation2d_pallas = jax.jit(_upsample_impl, static_argnums=(1, 2))


class UpsamplingInterpolation:
    """JAX/Pallas equivalent of the PyTorch UpsamplingInterpolation module.
    output_size = input_size * zoom_factor; output[..., ::factor, ::factor] = input."""

    def __init__(self, zoom_factor: int, mode: str = "bilinear"):
        assert mode == "bilinear", "only bilinear mode implemented"
        self.zoom_factor = int(zoom_factor)
        self.mode = mode

    def __call__(self, x: jax.Array) -> jax.Array:
        return upsampling_interpolation2d_pallas(x, self.zoom_factor, self.mode)


def _reference(x: jax.Array, z: int) -> jax.Array:
    # Pure-JAX reference of the same math (for sanity checking).
    B_h = jnp.asarray(_build_interp_reflect_matrix(x.shape[2], z))
    B_w = jnp.asarray(_build_interp_reflect_matrix(x.shape[3], z))
    return jnp.einsum("ph,nchw,qw->ncpq", B_h, x.astype(jnp.float32), B_w)


if __name__ == "__main__":
    key = jax.random.PRNGKey(0)
    N, C, H, W = 2, 4, 16, 16
    zoom = 2
    x = jax.random.normal(key, (N, C, H, W), dtype=jnp.float32)

    module = UpsamplingInterpolation(zoom_factor=zoom, mode="bilinear")
    out = jax.block_until_ready(module(x))

    ref = jax.block_until_ready(_reference(x, zoom))
    assert out.shape == (N, C, zoom * H, zoom * W)
    np.testing.assert_allclose(np.asarray(out), np.asarray(ref), rtol=1e-5, atol=1e-5)
    # Phasing check: output[..., ::factor, ::factor] == input
    np.testing.assert_allclose(
        np.asarray(out[:, :, ::zoom, ::zoom]), np.asarray(x), rtol=1e-5, atol=1e-5
    )

    print("KERNEL_OK")
</pallas_src>

<mosaic_0001>
module attributes {stable_mosaic.version = 11 : i64} {
  func.func @_fused_upsample_kernel(%arg0: i32, %arg1: memref<32x16xf32, #tpu.memory_space<vmem>>, %arg2: memref<16x32xf32, #tpu.memory_space<vmem>>, %arg3: memref<4x16x16xf32, #tpu.memory_space<vmem>>, %arg4: memref<4x32x32xf32, #tpu.memory_space<vmem>>) attributes {dimension_semantics = [#tpu.dimension_semantics<parallel>], iteration_bounds = array<i64: 2>, scalar_prefetch = 0 : i64, scratch_operands = 0 : i64, tpu.core_type = #tpu.core_type<tc>, window_params = [{pipeline_mode = #tpu.pipeline_mode<synchronous>, transform_indices = @transform_0, window_bounds = array<i64: 32, 16>}, {pipeline_mode = #tpu.pipeline_mode<synchronous>, transform_indices = @transform_1, window_bounds = array<i64: 16, 32>}, {transform_indices = @transform_2, window_bounds = array<i64: 4, 16, 16>}, {transform_indices = @transform_3, window_bounds = array<i64: 4, 32, 32>}]} {
    %c0 = arith.constant 0 : index
    %c0_0 = arith.constant 0 : index
    %c0_1 = arith.constant 0 : index
    %0 = vector.load %arg3[%c0, %c0_0, %c0_1] : memref<4x16x16xf32, #tpu.memory_space<vmem>>, vector<4x16x16xf32>
    %1 = vector.shape_cast %0 : vector<4x16x16xf32> to vector<64x16xf32>
    %c0_2 = arith.constant 0 : index
    %c0_3 = arith.constant 0 : index
    %2 = vector.load %arg2[%c0_2, %c0_3] : memref<16x32xf32, #tpu.memory_space<vmem>>, vector<16x32xf32>
    %cst = arith.constant dense<0.000000e+00> : vector<64x32xf32>
    %3 = tpu.matmul %1, %2, %cst {dimension_numbers = #tpu.dot_dimension_numbers<[1], [0], [0], [1], [0, 0, 1, 1], [], []>} : vector<64x16xf32>, vector<16x32xf32>, vector<64x32xf32> -> vector<64x32xf32>
    %4 = vector.shape_cast %3 : vector<64x32xf32> to vector<4x16x32xf32>
    %c0_4 = arith.constant 0 : index
    %c0_5 = arith.constant 0 : index
    %5 = vector.load %arg1[%c0_4, %c0_5] : memref<32x16xf32, #tpu.memory_space<vmem>>, vector<32x16xf32>
    %6 = vector.shape_cast %5 : vector<32x16xf32> to vector<1x32x16xf32>
    %7 = vector.shape_cast %6 : vector<1x32x16xf32> to vector<1x32x16xf32>
    %8 = vector.broadcast %7 : vector<1x32x16xf32> to vector<4x32x16xf32>
    "tpu.trace_start"() <{level = 10 : i32, message = "bph,bhq->bpq"}> : () -> ()
    %cst_6 = arith.constant dense<0.000000e+00> : vector<4x32x32xf32>
    %9 = tpu.matmul %8, %4, %cst_6 {dimension_numbers = #tpu.dot_dimension_numbers<[2], [1], [1], [2], [0, 0, 0, 1, 1, 2], [0], [0]>} : vector<4x32x16xf32>, vector<4x16x32xf32>, vector<4x32x32xf32> -> vector<4x32x32xf32>
    "tpu.trace_stop"() : () -> ()
    %c0_7 = arith.constant 0 : index
    %c0_8 = arith.constant 0 : index
    %c0_9 = arith.constant 0 : index
    %10 = vector.load %arg4[%c0_7, %c0_8, %c0_9] : memref<4x32x32xf32, #tpu.memory_space<vmem>>, vector<4x32x32xf32>
    tpu.vector_store %arg4[%c0_7, %c0_8, %c0_9], %9 {strides = array<i32>} : memref<4x32x32xf32, #tpu.memory_space<vmem>>, vector<4x32x32xf32>,
    return
  }
  func.func @transform_0(%arg0: i32) -> (i32, i32) {
    %c0_i32 = arith.constant 0 : i32
    %c0_i32_0 = arith.constant 0 : i32
    %c0_i32_1 = arith.constant 0 : i32
    return %c0_i32, %c0_i32_0 : i32, i32
  }
  func.func @transform_1(%arg0: i32) -> (i32, i32) {
    %c0_i32 = arith.constant 0 : i32
    %c0_i32_0 = arith.constant 0 : i32
    %c0_i32_1 = arith.constant 0 : i32
    return %c0_i32, %c0_i32_0 : i32, i32
  }
  func.func @transform_2(%arg0: i32) -> (i32, i32, i32) {
    %c0_i32 = arith.constant 0 : i32
    %c0_i32_0 = arith.constant 0 : i32
    %c0_i32_1 = arith.constant 0 : i32
    return %arg0, %c0_i32, %c0_i32_0 : i32, i32, i32
  }
  func.func @transform_3(%arg0: i32) -> (i32, i32, i32) {
    %c0_i32 = arith.constant 0 : i32
    %c0_i32_0 = arith.constant 0 : i32
    %c0_i32_1 = arith.constant 0 : i32
    return %arg0, %c0_i32, %c0_i32_0 : i32, i32, i32
  }
}

</mosaic_0001>

<llo_original>
// kernel: _upsample_impl.1
$region0: #{_upsample_impl.1}
  #allocation0 [shape = 'u32[]', space=smem, size = 0x4, offset = 0x4, fixed_abs, tag = 'smem constant byte address 0x4 - core index']
  #allocation1 [shape = 'u32[144,128]{1,0:T(1,128)}', space=vmem, size = 0x12000, scoped, tag = 'internal scratch']
  %s0 = inlined_call_operand.hbm [shape: f32[32,16], index: 0, kind: input, shape index: {}]
  %s1 = inlined_call_operand.hbm [shape: f32[16,32], index: 1, kind: input, shape index: {}]
  %s2 = inlined_call_operand.hbm [shape: f32[8,16,16], index: 2, kind: input, shape index: {}]
  %s3 = inlined_call_operand.hbm [shape: f32[8,32,32], index: 3, kind: output, shape index: {}]
  %s4 = sld [smem:[#allocation0]]
  $region57: #{_upsample_impl.1} parent=0
    _
  %s6 = ssub.s32 1, %s4
  %s7 = scalar_select 0, %s6, %s4
  $region1: #{_upsample_impl.1} parent=0
    #allocation2 [shape = 'u8[16384]{0}', space=vmem, size = 0x4000, scoped, tag = 'input window, operand 0, single buffered']
    #allocation3 [shape = 's32[2]{0}', space=sflag, size = 0x8, scoped, tag = 'scoped memory for _upsample_impl.1']
    #allocation4 [shape = 's32[2]{0}', space=sflag, size = 0x8, scoped, tag = 'scoped memory for _upsample_impl.1']
    #allocation5 [shape = 'u8[8192]{0}', space=vmem, size = 0x2000, scoped, tag = 'input window, operand 1, single buffered']
    #allocation6 [shape = 's32[1]{0}', space=sflag, size = 0x4, scoped, tag = 'scoped memory for _upsample_impl.1']
    #allocation7 [shape = 'u8[65536]{0}', space=vmem, size = 0x10000, scoped, tag = 'input window, operand 2']
    #allocation8 [shape = 'u8[131072]{0}', space=vmem, size = 0x20000, scoped, tag = 'output window, operand 0']
    %8 = vsyncpa [#allocation3], 0
    %9 = vsyncpa [#allocation6], 0
    %10 = vsyncpa [#allocation4], 0
    %s11 = scalar_lea.sflag [#allocation4], 1
    %12 = vsyncpa %s11, 0
    loop: start=0, step=1, limit=4
    $region2: #{_upsample_impl.1} parent=1 // loop_pre_header
      _
    $region3: #{_upsample_impl.1} parent=1 // loop_header
      %s14 = sphi 0, %s18
      %p15 = scmp.ge.s32.totalorder %s14, 4
      %s22 = sphi 0, %s22
      %s24 = sphi 0, %s22
      %s25 = sphi 0, %s24
      %s39 = sphi 0, %s25
      %s43 = sphi 0, %s43
      %s45 = sphi 0, %s43
      %s46 = sphi 0, %s45
      %s60 = sphi 0, %s46
      %s66 = sphi 0, %s68
      %s69 = sphi 0, %s66
      %s70 = sphi 0, %s69
      %s86 = sphi 0, %s70
      %s92 = sphi 0, %s94
      %s95 = sphi 0, %s92
      %s96 = sphi 0, %s95
      %s112 = sphi 0, %s96
    $region4: #{_upsample_impl.1} parent=1 // loop_header_branch
      %17 = sbr.rel (%p15) target = $region8
    $region5: #{_upsample_impl.1} parent=1 // loop_body
      %s19 = ssub.s32 %s14, 1
      %s20 = ssub.s32 %s14, 2
      %s21 = sadd.s32 %s14, 1
      %s23 = sadd.s32 %s22, 1
      %p26 = scmp.eq.s32.totalorder %s14, 1
      %p27 = scmp.ne.s32.totalorder %s22, %s24
      %p28 = scmp.eq.s32.totalorder %s14, 0
      %p29 = por %p27, %p28
      %p30 = scmp.ne.s32.totalorder %s22, %s24
      %p31 = scmp.eq.s32.totalorder %s19, 1
      %p32 = por %p30, %p31
      %p33 = scmp.ne.s32.totalorder %s24, %s25
      %p34 = scmp.eq.s32.totalorder %s19, 0
      %p35 = por %p33, %p34
      %p36 = scmp.ne.s32.totalorder %s24, %s25
      %p37 = scmp.eq.s32.totalorder %s20, 1
      %p38 = por %p36, %p37
      %p40 = scmp.ne.s32.totalorder %s25, %s39
      %p41 = scmp.eq.s32.totalorder %s20, 0
      %p42 = por %p40, %p41
      %s44 = sadd.s32 %s43, 1
      %p47 = scmp.eq.s32.totalorder %s14, 1
      %p48 = scmp.ne.s32.totalorder %s43, %s45
      %p49 = scmp.eq.s32.totalorder %s14, 0
      %p50 = por %p48, %p49
      %p51 = scmp.ne.s32.totalorder %s43, %s45
      %p52 = scmp.eq.s32.totalorder %s19, 1
      %p53 = por %p51, %p52
      %p54 = scmp.ne.s32.totalorder %s45, %s46
      %p55 = scmp.eq.s32.totalorder %s19, 0
      %p56 = por %p54, %p55
      %p57 = scmp.ne.s32.totalorder %s45, %s46
      %p58 = scmp.eq.s32.totalorder %s20, 1
      %p59 = por %p57, %p58
      %p61 = scmp.ne.s32.totalorder %s46, %s60
      %p62 = scmp.eq.s32.totalorder %s20, 0
      %p63 = por %p61, %p62
      %s64 = ssub.s32 %s14, %s21
      %p65 = scmp.eq.s32.totalorder %s64, 0
      %s67 = sadd.s32 %s66, 1
      %s68 = scalar_select %p65, %s66, %s67
      %p71 = pneg %p65
      %p72 = scmp.eq.s32.totalorder %s14, 1
      %p73 = por %p71, %p72
      %p74 = scmp.ne.s32.totalorder %s66, %s69
      %p75 = scmp.eq.s32.totalorder %s14, 0
      %p76 = por %p74, %p75
      %p77 = scmp.ne.s32.totalorder %s66, %s69
      %p78 = scmp.eq.s32.totalorder %s19, 1
      %p79 = por %p77, %p78
      %p80 = scmp.ne.s32.totalorder %s69, %s70
      %p81 = scmp.eq.s32.totalorder %s19, 0
      %p82 = por %p80, %p81
      %p83 = scmp.ne.s32.totalorder %s69, %s70
      %p84 = scmp.eq.s32.totalorder %s20, 1
      %p85 = por %p83, %p84
      %p87 = scmp.ne.s32.totalorder %s70, %s86
      %p88 = scmp.eq.s32.totalorder %s20, 0
      %p89 = por %p87, %p88
      %s90 = ssub.s32 %s14, %s21
      %p91 = scmp.eq.s32.totalorder %s90, 0
      %s93 = sadd.s32 %s92, 1
      %s94 = scalar_select %p91, %s92, %s93
      %p97 = pneg %p91
      %p98 = scmp.eq.s32.totalorder %s14, 1
      %p99 = por %p97, %p98
      %p100 = scmp.ne.s32.totalorder %s92, %s95
      %p101 = scmp.eq.s32.totalorder %s14, 0
      %p102 = por %p100, %p101
      %p103 = scmp.ne.s32.totalorder %s92, %s95
      %p104 = scmp.eq.s32.totalorder %s19, 1
      %p105 = por %p103, %p104
      %p106 = scmp.ne.s32.totalorder %s95, %s96
      %p107 = scmp.eq.s32.totalorder %s19, 0
      %p108 = por %p106, %p107
      %p109 = scmp.ne.s32.totalorder %s95, %s96
      %p110 = scmp.eq.s32.totalorder %s20, 1
      %p111 = por %p109, %p110
      %p113 = scmp.ne.s32.totalorder %s96, %s112
      %p114 = scmp.eq.s32.totalorder %s20, 0
      %p115 = por %p113, %p114
      %p116 = scmp.le.s32.totalorder 1, %s14
      %p117 = scmp.lt.s32.totalorder %s14, 3
      %p118 = pnand %p116, %p117
      %p119 = pneg %p118
      // Predicated region
      $region9: #{_upsample_impl.1} parent=5 // pred_check
        _
      $region10: #{_upsample_impl.1} parent=5 // pred_check_branch
        %121 = sbr.rel (%p118) target = $region12
      $region11: #{_upsample_impl.1} parent=5 // pred_region
        %s122 = ssub.s32 %s14, 1
        // Predicated region
        $region13: #{_upsample_impl.1} parent=11 // pred_check
          %p123 = pneg %p35
        $region14: #{_upsample_impl.1} parent=11 // pred_check_branch
          %125 = sbr.rel (%p123) target = $region16
        $region15: #{_upsample_impl.1} parent=11 // pred_region
          %s127 = ssub.s32 512, 512
          %128 = vsyncadd [#allocation3], %s127
          %s129 = sshll.u32 [#allocation2], 4
          %s130 = int_to_ptr.vmem [resolvable:$true] %s129
          %135 = dma.hbm_to_vmem [thread:$0]  %s0, 512, %s130, [#allocation3], 128, 128, 8
        $region16: #{_upsample_impl.1} parent=11 // pred_fallthru
          _
        // Predicated region
        $region17: #{_upsample_impl.1} parent=11 // pred_check
          %p136 = pneg %p56
        $region18: #{_upsample_impl.1} parent=11 // pred_check_branch
          %138 = sbr.rel (%p136) target = $region20
        $region19: #{_upsample_impl.1} parent=11 // pred_region
          %s140 = ssub.s32 256, 256
          %141 = vsyncadd [#allocation6], %s140
          %s142 = sshll.u32 [#allocation5], 4
          %s143 = int_to_ptr.vmem [resolvable:$true] %s142
          %148 = dma.hbm_to_vmem [thread:$0]  %s1, 256, %s143, [#allocation6], 128, 128, 8
        $region20: #{_upsample_impl.1} parent=11 // pred_fallthru
          _
      $region12: #{_upsample_impl.1} parent=5 // pred_fallthru
        _
      %p149 = scmp.lt.s32.totalorder %s14, 2
      // Predicated region
      $region21: #{_upsample_impl.1} parent=5 // pred_check
        %p150 = pneg %p149
      $region22: #{_upsample_impl.1} parent=5 // pred_check_branch
        %152 = sbr.rel (%p150) target = $region24
      $region23: #{_upsample_impl.1} parent=5 // pred_region
        // Predicated region
        $region25: #{_upsample_impl.1} parent=23 // pred_check
          %p153 = pneg %p76
        $region26: #{_upsample_impl.1} parent=23 // pred_check_branch
          %155 = sbr.rel (%p153) target = $region28
        $region27: #{_upsample_impl.1} parent=23 // pred_region
          %s156 = sand.u32 %s14, 1
          %s157 = scalar_lea.sflag [#allocation3], %s156
          %s158 = sand.u32 %s66, 1
          %s159 = smul.addr %s158, 64
          %s160 = scalar_lea.vmem [#allocation7], %s159
          %s161 = smul.u32 4, %s14
          %s163 = ssub.s32 1024, 1024
          %164 = vsyncadd %s157, %s163
          %s165 = smul.addr %s161, 2
          %s166 = smul.addr %s165, 128
          %s167 = scalar_lea.hbm %s2, %s166
          %s168 = sshll.u32 %s160, 4
          %s169 = int_to_ptr.vmem [resolvable:$true] %s168
          %174 = dma.hbm_to_vmem [thread:$0]  %s167, 1024, %s169, %s157, 128, 128, 8
        $region28: #{_upsample_impl.1} parent=23 // pred_fallthru
          _
      $region24: #{_upsample_impl.1} parent=5 // pred_fallthru
        _
      %p175 = scmp.le.s32.totalorder 1, %s14
      %p176 = scmp.lt.s32.totalorder %s14, 3
      %p177 = pnand %p175, %p176
      %p178 = pneg %p177
      // Predicated region
      $region29: #{_upsample_impl.1} parent=5 // pred_check
        _
      $region30: #{_upsample_impl.1} parent=5 // pred_check_branch
        %180 = sbr.rel (%p177) target = $region32
      $region31: #{_upsample_impl.1} parent=5 // pred_region
        %s181 = ssub.s32 %s14, 1
        // Predicated region
        $region33: #{_upsample_impl.1} parent=31 // pred_check
          %p182 = pneg %p35
        $region34: #{_upsample_impl.1} parent=31 // pred_check_branch
          %184 = sbr.rel (%p182) target = $region36
        $region35: #{_upsample_impl.1} parent=31 // pred_region
          %185 = dma.done [#allocation3], 512
        $region36: #{_upsample_impl.1} parent=31 // pred_fallthru
          _
        // Predicated region
        $region37: #{_upsample_impl.1} parent=31 // pred_check
          %p186 = pneg %p56
        $region38: #{_upsample_impl.1} parent=31 // pred_check_branch
          %188 = sbr.rel (%p186) target = $region40
        $region39: #{_upsample_impl.1} parent=31 // pred_region
          %189 = dma.done [#allocation6], 256
        $region40: #{_upsample_impl.1} parent=31 // pred_fallthru
          _
        %s190 = sand.u32 %s19, 1
        %s191 = scalar_lea.sflag [#allocation3], %s190
        %s192 = sand.u32 %s69, 1
        %s193 = smul.addr %s192, 64
        %s194 = scalar_lea.vmem [#allocation7], %s193
        // Predicated region
        $region41: #{_upsample_impl.1} parent=31 // pred_check
          %p195 = pneg %p82
        $region42: #{_upsample_impl.1} parent=31 // pred_check_branch
          %197 = sbr.rel (%p195) target = $region44
        $region43: #{_upsample_impl.1} parent=31 // pred_region
          %198 = dma.done %s191, 1024
        $region44: #{_upsample_impl.1} parent=31 // pred_fallthru
          _
        %p199 = pneg %p35
        %p200 = pneg %p32
        %p201 = pneg %p56
        %p202 = pneg %p53
        %s203 = sand.u32 %s19, 1
        %s204 = scalar_lea.sflag [#allocation3], %s203
        %s205 = sand.u32 %s69, 1
        %s206 = smul.addr %s205, 64
        %s207 = scalar_lea.vmem [#allocation7], %s206
        %p208 = pneg %p82
        %p209 = pneg %p79
        %p210 = pneg %p108
        %p211 = pneg %p105
        %s212 = sand.u32 %s95, 1
        %s213 = scalar_lea.sflag [#allocation4], %s212
        %s214 = sand.u32 %s95, 1
        %s215 = smul.addr %s214, 128
        %s216 = scalar_lea.vmem [#allocation8], %s215
        %s217 = smul.u32 4, %s19
        %s218 = smul.u32 4, %s19
        %v219 = vld [vmem:[%s194] sm:$0xff]
        %v220 = vld [vmem:[%s194 + $0x8] sm:$0xff]
        %v221 = vld [vmem:[%s194 + $0x10] sm:$0xff]
        %v222 = vld [vmem:[%s194 + $0x18] sm:$0xff]
        %v223 = vld [vmem:[%s194 + $0x20] sm:$0xff]
        %v224 = vld [vmem:[%s194 + $0x28] sm:$0xff]
        %v225 = vld [vmem:[%s194 + $0x30] sm:$0xff]
        %v226 = vld [vmem:[%s194 + $0x38] sm:$0xff]
        %v227 = vld [vmem:[#allocation5] sm:$0xff]
        %v228 = vld [vmem:[#allocation5 + $0x8] sm:$0xff]
        %vm229 = vcmask 130048
        %v231 = vsel %vm229, %v219, 0
        %v234 = vsel %vm229, %v220, 0
        %v237 = vsel %vm229, %v221, 0
        %v240 = vsel %vm229, %v222, 0
        %v243 = vsel %vm229, %v223, 0
        %v246 = vsel %vm229, %v224, 0
        %v249 = vsel %vm229, %v225, 0
        %v252 = vsel %vm229, %v226, 0
        %254 = vmatprep.subr.mxu0 0.0
        %255 = vmatpush1.msra.mxu0 %v227
        %256 = vmatprep.subr.mxu0 0.0
        %257 = vmatpush1.msra.mxu0 %v228
        %258 = vmatprep.subr.mxu0 0.0
        %259 = vmatpush1.msra.mxu0 0.0
        %260 = vmatprep.subr.mxu0 0.0
        %261 = vmatpush1.msra.mxu0 0.0
        %262 = vmatprep.subr.mxu0 0.0
        %263 = vmatpush1.msra.mxu0 0.0
        %264 = vmatprep.subr.mxu0 0.0
        %265 = vmatpush1.msra.mxu0 0.0
        %266 = vmatprep.subr.mxu0 0.0
        %267 = vmatpush1.msra.mxu0 0.0
        %268 = vmatprep.subr.mxu0 0.0
        %269 = vmatpush1.msra.mxu0 0.0
        %270 = vmatprep.subr.mxu0 0.0
        %271 = vmatpush1.msra.mxu0 0.0
        %272 = vmatprep.subr.mxu0 0.0
        %273 = vmatpush1.msra.mxu0 0.0
        %274 = vmatprep.subr.mxu0 0.0
        %275 = vmatpush1.msra.mxu0 0.0
        %276 = vmatprep.subr.mxu0 0.0
        %277 = vmatpush1.msra.mxu0 0.0
        %278 = vmatprep.subr.mxu0 0.0
        %279 = vmatpush1.msra.mxu0 0.0
        %280 = vmatprep.subr.mxu0 0.0
        %281 = vmatpush1.msra.mxu0 0.0
        %282 = vmatprep.subr.mxu0 0.0
        %283 = vmatpush1.msra.mxu0 0.0
        %284 = vmatprep.subr.mxu0 0.0
        %285 = vmatpush1.msra.mxu0 0.0
        %286 = vmatprep.subr.mxu0 0.0
        %287 = vmatpush1.msra.mxu0 0.0
        %288 = vmatprep.subr.mxu0 0.0
        %289 = vmatpush1.msra.mxu0 0.0
        %290 = vmatprep.subr.mxu0 0.0
        %291 = vmatpush1.msra.mxu0 0.0
        %292 = vmatprep.subr.mxu0 0.0
        %293 = vmatpush1.msra.mxu0 0.0
        %294 = vmatprep.subr.mxu0 0.0
        %295 = vmatpush1.msra.mxu0 0.0
        %296 = vmatprep.subr.mxu0 0.0
        %297 = vmatpush1.msra.mxu0 0.0
        %298 = vmatprep.subr.mxu0 0.0
        %299 = vmatpush1.msra.mxu0 0.0
        %300 = vmatprep.subr.mxu0 0.0
        %301 = vmatpush1.msra.mxu0 0.0
        %302 = vmatprep.subr.mxu0 0.0
        %303 = vmatpush1.msra.mxu0 0.0
        %304 = vmatprep.subr.mxu0 0.0
        %305 = vmatpush1.msra.mxu0 0.0
        %306 = vmatprep.subr.mxu0 0.0
        %307 = vmatpush1.msra.mxu0 0.0
        %308 = vmatprep.subr.mxu0 0.0
        %309 = vmatpush1.msra.mxu0 0.0
        %310 = vmatprep.subr.mxu0 0.0
        %311 = vmatpush1.msra.mxu0 0.0
        %312 = vmatprep.subr.mxu0 0.0
        %313 = vmatpush1.msra.mxu0 0.0
        %314 = vmatprep.subr.mxu0 0.0
        %315 = vmatpush1.msra.mxu0 0.0
        %316 = vmatprep.subr.mxu0 0.0
        %317 = vmatpush1.msra.mxu0 0.0
        %318 = vmatprep.mubr.f32.mxu0 0.0
        %319 = vmatmul.mubr.f32.gmra.mrb[0].mxu0 %v231
        %v320 = vpop.f32.mrb[0].mxu0
        %v321 = vadd.f32 0.0, %v320
        %v322 = vpop.f32.mrb[0].mxu0
        %323 = vmatprep.mubr.f32.mxu0 0.0
        %324 = vmatmul.mubr.f32.gmra.mrb[0].mxu0 %v234
        %v325 = vpop.f32.mrb[0].mxu0
        %v326 = vadd.f32 0.0, %v325
        %v327 = vpop.f32.mrb[0].mxu0
        %328 = vmatprep.mubr.f32.mxu0 0.0
        %329 = vmatmul.mubr.f32.gmra.mrb[0].mxu0 %v237
        %v330 = vpop.f32.mrb[0].mxu0
        %v331 = vadd.f32 0.0, %v330
        %v332 = vpop.f32.mrb[0].mxu0
        %333 = vmatprep.mubr.f32.mxu0 0.0
        %334 = vmatmul.mubr.f32.gmra.mrb[0].mxu0 %v240
        %v335 = vpop.f32.mrb[0].mxu0
        %v336 = vadd.f32 0.0, %v335
        %v337 = vpop.f32.mrb[0].mxu0
        %338 = vmatprep.mubr.f32.mxu0 0.0
        %339 = vmatmul.mubr.f32.gmra.mrb[0].mxu0 %v243
        %v340 = vpop.f32.mrb[0].mxu0
        %v341 = vadd.f32 0.0, %v340
        %v342 = vpop.f32.mrb[0].mxu0
        %343 = vmatprep.mubr.f32.mxu0 0.0
        %344 = vmatmul.mubr.f32.gmra.mrb[0].mxu0 %v246
        %v345 = vpop.f32.mrb[0].mxu0
        %v346 = vadd.f32 0.0, %v345
        %v347 = vpop.f32.mrb[0].mxu0
        %348 = vmatprep.mubr.f32.mxu0 0.0
        %349 = vmatmul.mubr.f32.gmra.mrb[0].mxu0 %v249
        %v350 = vpop.f32.mrb[0].mxu0
        %v351 = vadd.f32 0.0, %v350
        %v352 = vpop.f32.mrb[0].mxu0
        %353 = vmatprep.mubr.f32.mxu0 0.0
        %354 = vmatmul.mubr.f32.gmra.mrb[0].mxu0 %v252
        %v355 = vpop.f32.mrb[0].mxu0
        %v356 = vadd.f32 0.0, %v355
        %v357 = vpop.f32.mrb[0].mxu0
        %358 = vdwg.mxu0
        %v359 = vld [vmem:[#allocation2] sm:$0xff]
        %v360 = vld [vmem:[#allocation2 + $0x8] sm:$0xff]
        %v361 = vld [vmem:[#allocation2 + $0x10] sm:$0xff]
        %v362 = vld [vmem:[#allocation2 + $0x18] sm:$0xff]
        %v364 = vsel %vm229, %v359, 0
        %v367 = vsel %vm229, %v360, 0
        %v370 = vsel %vm229, %v361, 0
        %v373 = vsel %vm229, %v362, 0
        %375 = vmatprep.subr.mxu0 0.0
        %376 = vmatpush1.msra.mxu0 %v321
        %377 = vmatprep.subr.mxu0 0.0
        %378 = vmatpush1.msra.mxu0 %v326
        %379 = vmatprep.subr.mxu0 0.0
        %380 = vmatpush1.msra.mxu0 0.0
        %381 = vmatprep.subr.mxu0 0.0
        %382 = vmatpush1.msra.mxu0 0.0
        %383 = vmatprep.subr.mxu0 0.0
        %384 = vmatpush1.msra.mxu0 0.0
        %385 = vmatprep.subr.mxu0 0.0
        %386 = vmatpush1.msra.mxu0 0.0
        %387 = vmatprep.subr.mxu0 0.0
        %388 = vmatpush1.msra.mxu0 0.0
        %389 = vmatprep.subr.mxu0 0.0
        %390 = vmatpush1.msra.mxu0 0.0
        %391 = vmatprep.subr.mxu0 0.0
        %392 = vmatpush1.msra.mxu0 0.0
        %393 = vmatprep.subr.mxu0 0.0
        %394 = vmatpush1.msra.mxu0 0.0
        %395 = vmatprep.subr.mxu0 0.0
        %396 = vmatpush1.msra.mxu0 0.0
        %397 = vmatprep.subr.mxu0 0.0
        %398 = vmatpush1.msra.mxu0 0.0
        %399 = vmatprep.subr.mxu0 0.0
        %400 = vmatpush1.msra.mxu0 0.0
        %401 = vmatprep.subr.mxu0 0.0
        %402 = vmatpush1.msra.mxu0 0.0
        %403 = vmatprep.subr.mxu0 0.0
        %404 = vmatpush1.msra.mxu0 0.0
        %405 = vmatprep.subr.mxu0 0.0
        %406 = vmatpush1.msra.mxu0 0.0
        %407 = vmatprep.subr.mxu0 0.0
        %408 = vmatpush1.msra.mxu0 0.0
        %409 = vmatprep.subr.mxu0 0.0
        %410 = vmatpush1.msra.mxu0 0.0
        %411 = vmatprep.subr.mxu0 0.0
        %412 = vmatpush1.msra.mxu0 0.0
        %413 = vmatprep.subr.mxu0 0.0
        %414 = vmatpush1.msra.mxu0 0.0
        %415 = vmatprep.subr.mxu0 0.0
        %416 = vmatpush1.msra.mxu0 0.0
        %417 = vmatprep.subr.mxu0 0.0
        %418 = vmatpush1.msra.mxu0 0.0
        %419 = vmatprep.subr.mxu0 0.0
        %420 = vmatpush1.msra.mxu0 0.0
        %421 = vmatprep.subr.mxu0 0.0
        %422 = vmatpush1.msra.mxu0 0.0
        %423 = vmatprep.subr.mxu0 0.0
        %424 = vmatpush1.msra.mxu0 0.0
        %425 = vmatprep.subr.mxu0 0.0
        %426 = vmatpush1.msra.mxu0 0.0
        %427 = vmatprep.subr.mxu0 0.0
        %428 = vmatpush1.msra.mxu0 0.0
        %429 = vmatprep.subr.mxu0 0.0
        %430 = vmatpush1.msra.mxu0 0.0
        %431 = vmatprep.subr.mxu0 0.0
        %432 = vmatpush1.msra.mxu0 0.0
        %433 = vmatprep.subr.mxu0 0.0
        %434 = vmatpush1.msra.mxu0 0.0
        %435 = vmatprep.subr.mxu0 0.0
        %436 = vmatpush1.msra.mxu0 0.0
        %437 = vmatprep.subr.mxu0 0.0
        %438 = vmatpush1.msra.mxu0 0.0
        %439 = vmatprep.mubr.f32.mxu0 0.0
        %440 = vmatmul.mubr.f32.gmra.mrb[0].mxu0 %v364
        %v441 = vpop.f32.mrb[0].mxu0
        %v442 = vadd.f32 0.0, %v441
        %v443 = vpop.f32.mrb[0].mxu0
        %444 = vmatprep.mubr.f32.mxu0 0.0
        %445 = vmatmul.mubr.f32.gmra.mrb[0].mxu0 %v367
        %v446 = vpop.f32.mrb[0].mxu0
        %v447 = vadd.f32 0.0, %v446
        %v448 = vpop.f32.mrb[0].mxu0
        %449 = vmatprep.mubr.f32.mxu0 0.0
        %450 = vmatmul.mubr.f32.gmra.mrb[0].mxu0 %v370
        %v451 = vpop.f32.mrb[0].mxu0
        %v452 = vadd.f32 0.0, %v451
        %v453 = vpop.f32.mrb[0].mxu0
        %454 = vmatprep.mubr.f32.mxu0 0.0
        %455 = vmatmul.mubr.f32.gmra.mrb[0].mxu0 %v373
        %v456 = vpop.f32.mrb[0].mxu0
        %v457 = vadd.f32 0.0, %v456
        %v458 = vpop.f32.mrb[0].mxu0
        %459 = vdwg.mxu0
        %460 = vmatprep.subr.mxu0 0.0
        %461 = vmatpush1.msra.mxu0 %v331
        %462 = vmatprep.subr.mxu0 0.0
        %463 = vmatpush1.msra.mxu0 %v336
        %464 = vmatprep.subr.mxu0 0.0
        %465 = vmatpush1.msra.mxu0 0.0
        %466 = vmatprep.subr.mxu0 0.0
        %467 = vmatpush1.msra.mxu0 0.0
        %468 = vmatprep.subr.mxu0 0.0
        %469 = vmatpush1.msra.mxu0 0.0
        %470 = vmatprep.subr.mxu0 0.0
        %471 = vmatpush1.msra.mxu0 0.0
        %472 = vmatprep.subr.mxu0 0.0
        %473 = vmatpush1.msra.mxu0 0.0
        %474 = vmatprep.subr.mxu0 0.0
        %475 = vmatpush1.msra.mxu0 0.0
        %476 = vmatprep.subr.mxu0 0.0
        %477 = vmatpush1.msra.mxu0 0.0
        %478 = vmatprep.subr.mxu0 0.0
        %479 = vmatpush1.msra.mxu0 0.0
        %480 = vmatprep.subr.mxu0 0.0
        %481 = vmatpush1.msra.mxu0 0.0
        %482 = vmatprep.subr.mxu0 0.0
        %483 = vmatpush1.msra.mxu0 0.0
        %484 = vmatprep.subr.mxu0 0.0
        %485 = vmatpush1.msra.mxu0 0.0
        %486 = vmatprep.subr.mxu0 0.0
        %487 = vmatpush1.msra.mxu0 0.0
        %488 = vmatprep.subr.mxu0 0.0
        %489 = vmatpush1.msra.mxu0 0.0
        %490 = vmatprep.subr.mxu0 0.0
        %491 = vmatpush1.msra.mxu0 0.0
        %492 = vmatprep.subr.mxu0 0.0
        %493 = vmatpush1.msra.mxu0 0.0
        %494 = vmatprep.subr.mxu0 0.0
        %495 = vmatpush1.msra.mxu0 0.0
        %496 = vmatprep.subr.mxu0 0.0
        %497 = vmatpush1.msra.mxu0 0.0
        %498 = vmatprep.subr.mxu0 0.0
        %499 = vmatpush1.msra.mxu0 0.0
        %500 = vmatprep.subr.mxu0 0.0
        %501 = vmatpush1.msra.mxu0 0.0
        %502 = vmatprep.subr.mxu0 0.0
        %503 = vmatpush1.msra.mxu0 0.0
        %504 = vmatprep.subr.mxu0 0.0
        %505 = vmatpush1.msra.mxu0 0.0
        %506 = vmatprep.subr.mxu0 0.0
        %507 = vmatpush1.msra.mxu0 0.0
        %508 = vmatprep.subr.mxu0 0.0
        %509 = vmatpush1.msra.mxu0 0.0
        %510 = vmatprep.subr.mxu0 0.0
        %511 = vmatpush1.msra.mxu0 0.0
        %512 = vmatprep.subr.mxu0 0.0
        %513 = vmatpush1.msra.mxu0 0.0
        %514 = vmatprep.subr.mxu0 0.0
        %515 = vmatpush1.msra.mxu0 0.0
        %516 = vmatprep.subr.mxu0 0.0
        %517 = vmatpush1.msra.mxu0 0.0
        %518 = vmatprep.subr.mxu0 0.0
        %519 = vmatpush1.msra.mxu0 0.0
        %520 = vmatprep.subr.mxu0 0.0
        %521 = vmatpush1.msra.mxu0 0.0
        %522 = vmatprep.subr.mxu0 0.0
        %523 = vmatpush1.msra.mxu0 0.0
        %524 = vmatprep.mubr.f32.mxu0 0.0
        %525 = vmatmul.mubr.f32.gmra.mrb[0].mxu0 %v364
        %v526 = vpop.f32.mrb[0].mxu0
        %v527 = vadd.f32 0.0, %v526
        %v528 = vpop.f32.mrb[0].mxu0
        %529 = vmatprep.mubr.f32.mxu0 0.0
        %530 = vmatmul.mubr.f32.gmra.mrb[0].mxu0 %v367
        %v531 = vpop.f32.mrb[0].mxu0
        %v532 = vadd.f32 0.0, %v531
        %v533 = vpop.f32.mrb[0].mxu0
        %534 = vmatprep.mubr.f32.mxu0 0.0
        %535 = vmatmul.mubr.f32.gmra.mrb[0].mxu0 %v370
        %v536 = vpop.f32.mrb[0].mxu0
        %v537 = vadd.f32 0.0, %v536
        %v538 = vpop.f32.mrb[0].mxu0
        %539 = vmatprep.mubr.f32.mxu0 0.0
        %540 = vmatmul.mubr.f32.gmra.mrb[0].mxu0 %v373
        %v541 = vpop.f32.mrb[0].mxu0
        %v542 = vadd.f32 0.0, %v541
        %v543 = vpop.f32.mrb[0].mxu0
        %544 = vdwg.mxu0
        %545 = vmatprep.subr.mxu0 0.0
        %546 = vmatpush1.msra.mxu0 %v341
        %547 = vmatprep.subr.mxu0 0.0
        %548 = vmatpush1.msra.mxu0 %v346
        %549 = vmatprep.subr.mxu0 0.0
        %550 = vmatpush1.msra.mxu0 0.0
        %551 = vmatprep.subr.mxu0 0.0
        %552 = vmatpush1.msra.mxu0 0.0
        %553 = vmatprep.subr.mxu0 0.0
        %554 = vmatpush1.msra.mxu0 0.0
        %555 = vmatprep.subr.mxu0 0.0
        %556 = vmatpush1.msra.mxu0 0.0
        %557 = vmatprep.subr.mxu0 0.0
        %558 = vmatpush1.msra.mxu0 0.0
        %559 = vmatprep.subr.mxu0 0.0
        %560 = vmatpush1.msra.mxu0 0.0
        %561 = vmatprep.subr.mxu0 0.0
        %562 = vmatpush1.msra.mxu0 0.0
        %563 = vmatprep.subr.mxu0 0.0
        %564 = vmatpush1.msra.mxu0 0.0
        %565 = vmatprep.subr.mxu0 0.0
        %566 = vmatpush1.msra.mxu0 0.0
        %567 = vmatprep.subr.mxu0 0.0
        %568 = vmatpush1.msra.mxu0 0.0
        %569 = vmatprep.subr.mxu0 0.0
        %570 = vmatpush1.msra.mxu0 0.0
        %571 = vmatprep.subr.mxu0 0.0
        %572 = vmatpush1.msra.mxu0 0.0
        %573 = vmatprep.subr.mxu0 0.0
        %574 = vmatpush1.msra.mxu0 0.0
        %575 = vmatprep.subr.mxu0 0.0
        %576 = vmatpush1.msra.mxu0 0.0
        %577 = vmatprep.subr.mxu0 0.0
        %578 = vmatpush1.msra.mxu0 0.0
        %579 = vmatprep.subr.mxu0 0.0
        %580 = vmatpush1.msra.mxu0 0.0
        %581 = vmatprep.subr.mxu0 0.0
        %582 = vmatpush1.msra.mxu0 0.0
        %583 = vmatprep.subr.mxu0 0.0
        %584 = vmatpush1.msra.mxu0 0.0
        %585 = vmatprep.subr.mxu0 0.0
        %586 = vmatpush1.msra.mxu0 0.0
        %587 = vmatprep.subr.mxu0 0.0
        %588 = vmatpush1.msra.mxu0 0.0
        %589 = vmatprep.subr.mxu0 0.0
        %590 = vmatpush1.msra.mxu0 0.0
        %591 = vmatprep.subr.mxu0 0.0
        %592 = vmatpush1.msra.mxu0 0.0
        %593 = vmatprep.subr.mxu0 0.0
        %594 = vmatpush1.msra.mxu0 0.0
        %595 = vmatprep.subr.mxu0 0.0
        %596 = vmatpush1.msra.mxu0 0.0
        %597 = vmatprep.subr.mxu0 0.0
        %598 = vmatpush1.msra.mxu0 0.0
        %599 = vmatprep.subr.mxu0 0.0
        %600 = vmatpush1.msra.mxu0 0.0
        %601 = vmatprep.subr.mxu0 0.0
        %602 = vmatpush1.msra.mxu0 0.0
        %603 = vmatprep.subr.mxu0 0.0
        %604 = vmatpush1.msra.mxu0 0.0
        %605 = vmatprep.subr.mxu0 0.0
        %606 = vmatpush1.msra.mxu0 0.0
        %607 = vmatprep.subr.mxu0 0.0
        %608 = vmatpush1.msra.mxu0 0.0
        %609 = vmatprep.mubr.f32.mxu0 0.0
        %610 = vmatmul.mubr.f32.gmra.mrb[0].mxu0 %v364
        %v611 = vpop.f32.mrb[0].mxu0
        %v612 = vadd.f32 0.0, %v611
        %v613 = vpop.f32.mrb[0].mxu0
        %614 = vmatprep.mubr.f32.mxu0 0.0
        %615 = vmatmul.mubr.f32.gmra.mrb[0].mxu0 %v367
        %v616 = vpop.f32.mrb[0].mxu0
        %v617 = vadd.f32 0.0, %v616
        %v618 = vpop.f32.mrb[0].mxu0
        %619 = vmatprep.mubr.f32.mxu0 0.0
        %620 = vmatmul.mubr.f32.gmra.mrb[0].mxu0 %v370
        %v621 = vpop.f32.mrb[0].mxu0
        %v622 = vadd.f32 0.0, %v621
        %v623 = vpop.f32.mrb[0].mxu0
        %624 = vmatprep.mubr.f32.mxu0 0.0
        %625 = vmatmul.mubr.f32.gmra.mrb[0].mxu0 %v373
        %v626 = vpop.f32.mrb[0].mxu0
        %v627 = vadd.f32 0.0, %v626
        %v628 = vpop.f32.mrb[0].mxu0
        %629 = vdwg.mxu0
        %630 = vmatprep.subr.mxu0 0.0
        %631 = vmatpush1.msra.mxu0 %v351
        %632 = vmatprep.subr.mxu0 0.0
        %633 = vmatpush1.msra.mxu0 %v356
        %634 = vmatprep.subr.mxu0 0.0
        %635 = vmatpush1.msra.mxu0 0.0
        %636 = vmatprep.subr.mxu0 0.0
        %637 = vmatpush1.msra.mxu0 0.0
        %638 = vmatprep.subr.mxu0 0.0
        %639 = vmatpush1.msra.mxu0 0.0
        %640 = vmatprep.subr.mxu0 0.0
        %641 = vmatpush1.msra.mxu0 0.0
        %642 = vmatprep.subr.mxu0 0.0
        %643 = vmatpush1.msra.mxu0 0.0
        %644 = vmatprep.subr.mxu0 0.0
        %645 = vmatpush1.msra.mxu0 0.0
        %646 = vmatprep.subr.mxu0 0.0
        %647 = vmatpush1.msra.mxu0 0.0
        %648 = vmatprep.subr.mxu0 0.0
        %649 = vmatpush1.msra.mxu0 0.0
        %650 = vmatprep.subr.mxu0 0.0
        %651 = vmatpush1.msra.mxu0 0.0
        %652 = vmatprep.subr.mxu0 0.0
        %653 = vmatpush1.msra.mxu0 0.0
        %654 = vmatprep.subr.mxu0 0.0
        %655 = vmatpush1.msra.mxu0 0.0
        %656 = vmatprep.subr.mxu0 0.0
        %657 = vmatpush1.msra.mxu0 0.0
        %658 = vmatprep.subr.mxu0 0.0
        %659 = vmatpush1.msra.mxu0 0.0
        %660 = vmatprep.subr.mxu0 0.0
        %661 = vmatpush1.msra.mxu0 0.0
        %662 = vmatprep.subr.mxu0 0.0
        %663 = vmatpush1.msra.mxu0 0.0
        %664 = vmatprep.subr.mxu0 0.0
        %665 = vmatpush1.msra.mxu0 0.0
        %666 = vmatprep.subr.mxu0 0.0
        %667 = vmatpush1.msra.mxu0 0.0
        %668 = vmatprep.subr.mxu0 0.0
        %669 = vmatpush1.msra.mxu0 0.0
        %670 = vmatprep.subr.mxu0 0.0
        %671 = vmatpush1.msra.mxu0 0.0
        %672 = vmatprep.subr.mxu0 0.0
        %673 = vmatpush1.msra.mxu0 0.0
        %674 = vmatprep.subr.mxu0 0.0
        %675 = vmatpush1.msra.mxu0 0.0
        %676 = vmatprep.subr.mxu0 0.0
        %677 = vmatpush1.msra.mxu0 0.0
        %678 = vmatprep.subr.mxu0 0.0
        %679 = vmatpush1.msra.mxu0 0.0
        %680 = vmatprep.subr.mxu0 0.0
        %681 = vmatpush1.msra.mxu0 0.0
        %682 = vmatprep.subr.mxu0 0.0
        %683 = vmatpush1.msra.mxu0 0.0
        %684 = vmatprep.subr.mxu0 0.0
        %685 = vmatpush1.msra.mxu0 0.0
        %686 = vmatprep.subr.mxu0 0.0
        %687 = vmatpush1.msra.mxu0 0.0
        %688 = vmatprep.subr.mxu0 0.0
        %689 = vmatpush1.msra.mxu0 0.0
        %690 = vmatprep.subr.mxu0 0.0
        %691 = vmatpush1.msra.mxu0 0.0
        %692 = vmatprep.subr.mxu0 0.0
        %693 = vmatpush1.msra.mxu0 0.0
        %694 = vmatprep.mubr.f32.mxu0 0.0
        %695 = vmatmul.mubr.f32.gmra.mrb[0].mxu0 %v364
        %v696 = vpop.f32.mrb[0].mxu0
        %v697 = vadd.f32 0.0, %v696
        %v698 = vpop.f32.mrb[0].mxu0
        %699 = vmatprep.mubr.f32.mxu0 0.0
        %700 = vmatmul.mubr.f32.gmra.mrb[0].mxu0 %v367
        %v701 = vpop.f32.mrb[0].mxu0
        %v702 = vadd.f32 0.0, %v701
        %v703 = vpop.f32.mrb[0].mxu0
        %704 = vmatprep.mubr.f32.mxu0 0.0
        %705 = vmatmul.mubr.f32.gmra.mrb[0].mxu0 %v370
        %v706 = vpop.f32.mrb[0].mxu0
        %v707 = vadd.f32 0.0, %v706
        %v708 = vpop.f32.mrb[0].mxu0
        %709 = vmatprep.mubr.f32.mxu0 0.0
        %710 = vmatmul.mubr.f32.gmra.mrb[0].mxu0 %v373
        %v711 = vpop.f32.mrb[0].mxu0
        %v712 = vadd.f32 0.0, %v711
        %v713 = vpop.f32.mrb[0].mxu0
        %714 = vdwg.mxu0
        %vm715 = vcmask 261120
        %716 = vst.msk [vmem:[%s216] sm:$0xff] %vm715, %v442
        %717 = vst.msk [vmem:[%s216 + $0x8] sm:$0xff] %vm715, %v447
        %718 = vst.msk [vmem:[%s216 + $0x10] sm:$0xff] %vm715, %v452
        %719 = vst.msk [vmem:[%s216 + $0x18] sm:$0xff] %vm715, %v457
        %720 = vst.msk [vmem:[%s216 + $0x20] sm:$0xff] %vm715, %v527
        %721 = vst.msk [vmem:[%s216 + $0x28] sm:$0xff] %vm715, %v532
        %722 = vst.msk [vmem:[%s216 + $0x30] sm:$0xff] %vm715, %v537
        %723 = vst.msk [vmem:[%s216 + $0x38] sm:$0xff] %vm715, %v542
        %724 = vst.msk [vmem:[%s216 + $0x40] sm:$0xff] %vm715, %v612
        %725 = vst.msk [vmem:[%s216 + $0x48] sm:$0xff] %vm715, %v617
        %726 = vst.msk [vmem:[%s216 + $0x50] sm:$0xff] %vm715, %v622
        %727 = vst.msk [vmem:[%s216 + $0x58] sm:$0xff] %vm715, %v627
        %728 = vst.msk [vmem:[%s216 + $0x60] sm:$0xff] %vm715, %v697
        %729 = vst.msk [vmem:[%s216 + $0x68] sm:$0xff] %vm715, %v702
        %730 = vst.msk [vmem:[%s216 + $0x70] sm:$0xff] %vm715, %v707
        %731 = vst.msk [vmem:[%s216 + $0x78] sm:$0xff] %vm715, %v712
        %s732 = sand.u32 %s95, 1
        %s733 = scalar_lea.sflag [#allocation4], %s732
        %s734 = sand.u32 %s95, 1
        %s735 = smul.addr %s734, 128
        %s736 = scalar_lea.vmem [#allocation8], %s735
        // Predicated region
        $region45: #{_upsample_impl.1} parent=31 // pred_check
          %p737 = pneg %p105
        $region46: #{_upsample_impl.1} parent=31 // pred_check_branch
          %739 = sbr.rel (%p737) target = $region48
        $region47: #{_upsample_impl.1} parent=31 // pred_region
          %s740 = smul.u32 4, %s19
          %s742 = ssub.s32 2048, 2048
          %743 = vsyncadd %s733, %s742
          %s744 = smul.addr %s740, 4
          %s745 = smul.addr %s744, 128
          %s746 = scalar_lea.hbm %s3, %s745
          %s747 = sshll.u32 %s736, 4
          %s748 = int_to_ptr.vmem [resolvable:$true] %s747
          %753 = dma.vmem_to_hbm [thread:$0]  %s748, 2048, %s746, %s733, 128, 128, 8
        $region48: #{_upsample_impl.1} parent=31 // pred_fallthru
          _
      $region32: #{_upsample_impl.1} parent=5 // pred_fallthru
        _
      %p754 = scmp.le.s32.totalorder 2, %s14
      // Predicated region
      $region49: #{_upsample_impl.1} parent=5 // pred_check
        %p755 = pneg %p754
      $region50: #{_upsample_impl.1} parent=5 // pred_check_branch
        %757 = sbr.rel (%p755) target = $region52
      $region51: #{_upsample_impl.1} parent=5 // pred_region
        %s758 = ssub.s32 %s14, 2
        // Predicated region
        $region53: #{_upsample_impl.1} parent=51 // pred_check
          %p759 = pneg %p111
        $region54: #{_upsample_impl.1} parent=51 // pred_check_branch
          %761 = sbr.rel (%p759) target = $region56
        $region55: #{_upsample_impl.1} parent=51 // pred_region
          %s762 = sand.u32 %s96, 1
          %s763 = scalar_lea.sflag [#allocation4], %s762
          %s764 = sand.u32 %s96, 1
          %s765 = smul.addr %s764, 128
          %s766 = scalar_lea.vmem [#allocation8], %s765
          %767 = dma.done %s763, 2048
        $region56: #{_upsample_impl.1} parent=51 // pred_fallthru
          _
      $region52: #{_upsample_impl.1} parent=5 // pred_fallthru
        _
    $region6: #{_upsample_impl.1} parent=1 // loop_footer
      %s18 = sadd.s32 1, %s14
    $region7: #{_upsample_impl.1} parent=1 // loop_footer_branch
      %13 = sbr.rel target = $region3
    $region8: #{_upsample_impl.1} parent=1 // loop_exit
      _
    %768 = vsyncpa [#allocation3], 1
    %s769 = scalar_lea.sflag [#allocation3], 1
    %770 = vsyncpa %s769, 1
    %771 = vsyncpa [#allocation6], 1
    %772 = vsyncpa [#allocation4], 1
    %s773 = scalar_lea.sflag [#allocation4], 1
    %774 = vsyncpa %s773, 1

</llo_original>
